<compile_context>
chip_gen: v6e
topology: v6e:2x2x1
jax: 0.10.0
libtpu: 0.0.40
codegen_flags: <defaults>
</compile_context>

<pallas_src>
import jax
import jax.numpy as jnp
from jax.experimental import pallas as pl
from jax.experimental.pallas import tpu as pltpu

LANE = 128  # TPU lane width: batch axis (lanes) padded to multiples of this


def _round_up(n, m):
    return ((n + m - 1) // m) * m


def _cdiv(a, b):
    return -(-a // b)


def _choose_tiling(B, tm_cap, min_tiles):
    """Pick (TM, num_tiles, Bp): TM multiple of 128, Bp = num_tiles*TM >= B.

    Prefers >= min_tiles tiles (v7x megacore), tiles <= tm_cap rows, and the
    candidate with the least batch padding.
    """
    B128 = _round_up(max(B, 1), LANE)
    groups = B128 // LANE
    desired = min(groups, max(min_tiles, _cdiv(B128, tm_cap)))
    candidates = []
    for gpt in {_cdiv(groups, desired), max(1, groups // desired)}:
        nt = _cdiv(groups, gpt)
        candidates.append((nt * gpt * LANE, nt, gpt * LANE))  # (Bp, num_tiles, TM)
    Bp, num_tiles, TM = min(candidates)  # least padding, then fewest tiles
    return TM, num_tiles, Bp


def controller_kernel(xT_ref, w1T_ref, b1_ref, w2T_ref, b2_ref, w3T_ref, b3_ref, yT_ref):
    """Fused 3-layer MLP on a transposed (features x batch) tile.

    bf16 matmul inputs, f32 accumulate / bias / relu / log. Output tile
    (N_pad8, TM) is lane-dense on the batch axis -> unmasked stores.
    """
    xT = xT_ref[...]  # (K, TM) bf16, batch on lanes
    h1 = jnp.dot(w1T_ref[...], xT, preferred_element_type=jnp.float32) + b1_ref[...]
    h1 = jnp.maximum(h1, 0.0).astype(jnp.bfloat16)                      # (H1, TM)
    h2 = jnp.dot(w2T_ref[...], h1, preferred_element_type=jnp.float32) + b2_ref[...]
    h2 = jnp.maximum(h2, 0.0).astype(jnp.bfloat16)                      # (H2, TM)
    h3 = jnp.dot(w3T_ref[...], h2, preferred_element_type=jnp.float32) + b3_ref[...]
    h3 = jnp.maximum(h3, 0.0)                                           # (N_pad, TM) f32
    yT_ref[...] = jnp.log(h3 + 0.0001)


def controller_forward(x, params, *, tm_cap=2048, min_tiles=2):
    """JAX wrapper mirroring Controller.forward. Returns (y, None, None)."""
    if x.ndim == 1:
        x = x[None, :]
    w1, b1, w2, b2, w3, b3 = params  # w: (in, out), b: (1, out)
    B, K = x.shape
    H1 = w1.shape[1]
    H2 = w2.shape[1]
    size_output = w3.shape[1]

    # ---- batch tiling (batch lives on lanes) ----
    TM, num_tiles, Bp = _choose_tiling(B, tm_cap, min_tiles)

    # ---- transposed / padded operands (tiny XLA ops outside the kernel) ----
    xT = jnp.pad(x, ((0, Bp - B), (0, 0))).astype(jnp.bfloat16).T        # (K, Bp)
    w1T = w1.T.astype(jnp.bfloat16)                                      # (H1, K)
    w2T = w2.T.astype(jnp.bfloat16)                                      # (H2, H1)
    # pad output features only up to the f32 sublane tile (8), not 128 lanes
    N_pad = _round_up(size_output, 8)
    w3T = jnp.pad(w3, ((0, 0), (0, N_pad - size_output))).T.astype(jnp.bfloat16)  # (N_pad, H2)
    b1c = b1.T.astype(jnp.float32)                                       # (H1, 1)
    b2c = b2.T.astype(jnp.float32)                                       # (H2, 1)
    b3c = jnp.pad(b3, ((0, 0), (0, N_pad - size_output))).T.astype(jnp.float32)   # (N_pad, 1)

    yT = pl.pallas_call(
        controller_kernel,
        out_shape=jax.ShapeDtypeStruct((N_pad, Bp), jnp.float32),
        grid=(num_tiles,),
        in_specs=[
            pl.BlockSpec((K, TM), lambda i: (0, i)),      # x^T tile (streamed, pipelined)
            pl.BlockSpec((H1, K), lambda i: (0, 0)),      # W1^T (VMEM-resident)
            pl.BlockSpec((H1, 1), lambda i: (0, 0)),      # b1 (column)
            pl.BlockSpec((H2, H1), lambda i: (0, 0)),     # W2^T
            pl.BlockSpec((H2, 1), lambda i: (0, 0)),      # b2
            pl.BlockSpec((N_pad, H2), lambda i: (0, 0)),  # W3^T (sublane-padded to 8)
            pl.BlockSpec((N_pad, 1), lambda i: (0, 0)),   # b3
        ],
        out_specs=pl.BlockSpec((N_pad, TM), lambda i: (0, i)),
        compiler_params=pltpu.CompilerParams(
            dimension_semantics=("parallel",),            # shards batch tiles on v7x
            vmem_limit_bytes=32 * 1024 * 1024,            # safe headroom incl. v5e
        ),
    )(xT, w1T, b1c, w2T, b2c, w3T, b3c)

    y = yT[:size_output, :B].T  # tiny (size_output x B) slice + transpose
    return (y, None, None)


def init_controller_params(key, size_input, size_output):
    """Deterministic init mimicking nn.Linear shapes (stored (in, out))."""
    k1, k2, k3, k4, k5, k6 = jax.random.split(key, 6)

    def linear_init(kw, kb, fan_in, fan_out):
        bound = 1.0 / (fan_in ** 0.5)
        w = jax.random.uniform(kw, (fan_in, fan_out), jnp.float32, -bound, bound)
        b = jax.random.uniform(kb, (1, fan_out), jnp.float32, -bound, bound)
        return w, b

    w1, b1 = linear_init(k1, k2, size_input, 64)
    w2, b2 = linear_init(k3, k4, 64, 64)
    w3, b3 = linear_init(k5, k6, 64, size_output)
    return (w1, b1, w2, b2, w3, b3)


def controller_reference(x, params):
    """Plain-JAX reference replicating the kernel's mixed precision and
    transposed accumulation orientation (bf16 matmul inputs, f32 accumulate)."""
    if x.ndim == 1:
        x = x[None, :]
    w1, b1, w2, b2, w3, b3 = params
    xT = x.T.astype(jnp.bfloat16)
    h = jnp.dot(w1.T.astype(jnp.bfloat16), xT,
                preferred_element_type=jnp.float32) + b1.T
    h = jnp.maximum(h, 0.0).astype(jnp.bfloat16)
    h = jnp.dot(w2.T.astype(jnp.bfloat16), h,
                preferred_element_type=jnp.float32) + b2.T
    h = jnp.maximum(h, 0.0).astype(jnp.bfloat16)
    y = jnp.dot(w3.T.astype(jnp.bfloat16), h,
                preferred_element_type=jnp.float32) + b3.T
    y = jnp.maximum(y, 0.0)
    return jnp.log(y + 0.0001).T


if __name__ == "__main__":
    key = jax.random.PRNGKey(0)
    k_param, k_x1, k_x2 = jax.random.split(key, 3)

    size_input = 32
    size_output = 8
    params = init_controller_params(k_param, size_input, size_output)

    # small batch (single-tile path, matches the module's demo usage)
    x_small = jax.random.normal(k_x1, (2, size_input), dtype=jnp.float32)
    y_small, _, _ = controller_forward(x_small, params)
    y_small = jax.block_until_ready(y_small)
    y_small_ref = controller_reference(x_small, params)
    assert y_small.shape == (2, size_output)
    assert jnp.allclose(y_small, y_small_ref, atol=1e-3, rtol=1e-3), "small-batch mismatch"

    # larger, non-multiple-of-128 batch (exercises multi-tile grid + padding path)
    x_large = jax.random.normal(k_x2, (300, size_input), dtype=jnp.float32)
    y_large, _, _ = controller_forward(x_large, params)
    y_large = jax.block_until_ready(y_large)
    y_large_ref = controller_reference(x_large, params)
    assert y_large.shape == (300, size_output)
    assert jnp.allclose(y_large, y_large_ref, atol=1e-3, rtol=1e-3), "large-batch mismatch"

    print("KERNEL_OK")
</pallas_src>

<mosaic_0001>
module attributes {stable_mosaic.version = 11 : i64} {
  func.func @controller_kernel(%arg0: i32, %arg1: memref<32x128xbf16, #tpu.memory_space<vmem>>, %arg2: memref<64x32xbf16, #tpu.memory_space<vmem>>, %arg3: memref<64x1xf32, #tpu.memory_space<vmem>>, %arg4: memref<64x64xbf16, #tpu.memory_space<vmem>>, %arg5: memref<64x1xf32, #tpu.memory_space<vmem>>, %arg6: memref<8x64xbf16, #tpu.memory_space<vmem>>, %arg7: memref<8x1xf32, #tpu.memory_space<vmem>>, %arg8: memref<8x128xf32, #tpu.memory_space<vmem>>) attributes {dimension_semantics = [#tpu.dimension_semantics<parallel>], iteration_bounds = array<i64: 1>, scalar_prefetch = 0 : i64, scratch_operands = 0 : i64, tpu.core_type = #tpu.core_type<tc>, window_params = [{transform_indices = @transform_0, window_bounds = array<i64: 32, 128>}, {pipeline_mode = #tpu.pipeline_mode<synchronous>, transform_indices = @transform_1, window_bounds = array<i64: 64, 32>}, {pipeline_mode = #tpu.pipeline_mode<synchronous>, transform_indices = @transform_2, window_bounds = array<i64: 64, 1>}, {pipeline_mode = #tpu.pipeline_mode<synchronous>, transform_indices = @transform_3, window_bounds = array<i64: 64, 64>}, {pipeline_mode = #tpu.pipeline_mode<synchronous>, transform_indices = @transform_4, window_bounds = array<i64: 64, 1>}, {pipeline_mode = #tpu.pipeline_mode<synchronous>, transform_indices = @transform_5, window_bounds = array<i64: 8, 64>}, {pipeline_mode = #tpu.pipeline_mode<synchronous>, transform_indices = @transform_6, window_bounds = array<i64: 8, 1>}, {transform_indices = @transform_7, window_bounds = array<i64: 8, 128>}]} {
    %c0 = arith.constant 0 : index
    %c0_0 = arith.constant 0 : index
    %0 = vector.load %arg1[%c0, %c0_0] : memref<32x128xbf16, #tpu.memory_space<vmem>>, vector<32x128xbf16>
    %c0_1 = arith.constant 0 : index
    %c0_2 = arith.constant 0 : index
    %1 = vector.load %arg2[%c0_1, %c0_2] : memref<64x32xbf16, #tpu.memory_space<vmem>>, vector<64x32xbf16>
    %cst = arith.constant dense<0.000000e+00> : vector<64x128xf32>
    %2 = tpu.matmul %1, %0, %cst {dimension_numbers = #tpu.dot_dimension_numbers<[1], [0], [0], [1], [0, 0, 1, 1], [], []>} : vector<64x32xbf16>, vector<32x128xbf16>, vector<64x128xf32> -> vector<64x128xf32>
    %c0_3 = arith.constant 0 : index
    %c0_4 = arith.constant 0 : index
    %3 = vector.load %arg3[%c0_3, %c0_4] : memref<64x1xf32, #tpu.memory_space<vmem>>, vector<64x1xf32>
    %4 = vector.broadcast %3 : vector<64x1xf32> to vector<64x128xf32>
    %5 = arith.addf %2, %4 : vector<64x128xf32>
    %cst_5 = arith.constant 0.000000e+00 : f32
    %6 = vector.broadcast %cst_5 : f32 to vector<64x128xf32>
    %7 = arith.maximumf %5, %6 : vector<64x128xf32>
    %8 = arith.truncf %7 : vector<64x128xf32> to vector<64x128xbf16>
    %c0_6 = arith.constant 0 : index
    %c0_7 = arith.constant 0 : index
    %9 = vector.load %arg4[%c0_6, %c0_7] : memref<64x64xbf16, #tpu.memory_space<vmem>>, vector<64x64xbf16>
    %cst_8 = arith.constant dense<0.000000e+00> : vector<64x128xf32>
    %10 = tpu.matmul %9, %8, %cst_8 {dimension_numbers = #tpu.dot_dimension_numbers<[1], [0], [0], [1], [0, 0, 1, 1], [], []>} : vector<64x64xbf16>, vector<64x128xbf16>, vector<64x128xf32> -> vector<64x128xf32>
    %c0_9 = arith.constant 0 : index
    %c0_10 = arith.constant 0 : index
    %11 = vector.load %arg5[%c0_9, %c0_10] : memref<64x1xf32, #tpu.memory_space<vmem>>, vector<64x1xf32>
    %12 = vector.broadcast %11 : vector<64x1xf32> to vector<64x128xf32>
    %13 = arith.addf %10, %12 : vector<64x128xf32>
    %cst_11 = arith.constant 0.000000e+00 : f32
    %14 = vector.broadcast %cst_11 : f32 to vector<64x128xf32>
    %15 = arith.maximumf %13, %14 : vector<64x128xf32>
    %16 = arith.truncf %15 : vector<64x128xf32> to vector<64x128xbf16>
    %c0_12 = arith.constant 0 : index
    %c0_13 = arith.constant 0 : index
    %17 = vector.load %arg6[%c0_12, %c0_13] : memref<8x64xbf16, #tpu.memory_space<vmem>>, vector<8x64xbf16>
    %cst_14 = arith.constant dense<0.000000e+00> : vector<8x128xf32>
    %18 = tpu.matmul %17, %16, %cst_14 {dimension_numbers = #tpu.dot_dimension_numbers<[1], [0], [0], [1], [0, 0, 1, 1], [], []>} : vector<8x64xbf16>, vector<64x128xbf16>, vector<8x128xf32> -> vector<8x128xf32>
    %c0_15 = arith.constant 0 : index
    %c0_16 = arith.constant 0 : index
    %19 = vector.load %arg7[%c0_15, %c0_16] : memref<8x1xf32, #tpu.memory_space<vmem>>, vector<8x1xf32>
    %20 = vector.broadcast %19 : vector<8x1xf32> to vector<8x128xf32>
    %21 = arith.addf %18, %20 : vector<8x128xf32>
    %cst_17 = arith.constant 0.000000e+00 : f32
    %22 = vector.broadcast %cst_17 : f32 to vector<8x128xf32>
    %23 = arith.maximumf %21, %22 : vector<8x128xf32>
    %cst_18 = arith.constant 9.99999974E-5 : f32
    %24 = vector.broadcast %cst_18 : f32 to vector<8x128xf32>
    %25 = arith.addf %23, %24 : vector<8x128xf32>
    %26 = math.log %25 : vector<8x128xf32>
    %c0_19 = arith.constant 0 : index
    %c0_20 = arith.constant 0 : index
    %27 = vector.load %arg8[%c0_19, %c0_20] : memref<8x128xf32, #tpu.memory_space<vmem>>, vector<8x128xf32>
    tpu.vector_store %arg8[%c0_19, %c0_20], %26 {strides = array<i32>} : memref<8x128xf32, #tpu.memory_space<vmem>>, vector<8x128xf32>,
    return
  }
  func.func @transform_0(%arg0: i32) -> (i32, i32) {
    %c0_i32 = arith.constant 0 : i32
    %c0_i32_0 = arith.constant 0 : i32
    return %c0_i32, %arg0 : i32, i32
  }
  func.func @transform_1(%arg0: i32) -> (i32, i32) {
    %c0_i32 = arith.constant 0 : i32
    %c0_i32_0 = arith.constant 0 : i32
    %c0_i32_1 = arith.constant 0 : i32
    return %c0_i32, %c0_i32_0 : i32, i32
  }
  func.func @transform_2(%arg0: i32) -> (i32, i32) {
    %c0_i32 = arith.constant 0 : i32
    %c0_i32_0 = arith.constant 0 : i32
    %c0_i32_1 = arith.constant 0 : i32
    return %c0_i32, %c0_i32_0 : i32, i32
  }
  func.func @transform_3(%arg0: i32) -> (i32, i32) {
    %c0_i32 = arith.constant 0 : i32
    %c0_i32_0 = arith.constant 0 : i32
    %c0_i32_1 = arith.constant 0 : i32
    return %c0_i32, %c0_i32_0 : i32, i32
  }
  func.func @transform_4(%arg0: i32) -> (i32, i32) {
    %c0_i32 = arith.constant 0 : i32
    %c0_i32_0 = arith.constant 0 : i32
    %c0_i32_1 = arith.constant 0 : i32
    return %c0_i32, %c0_i32_0 : i32, i32
  }
  func.func @transform_5(%arg0: i32) -> (i32, i32) {
    %c0_i32 = arith.constant 0 : i32
    %c0_i32_0 = arith.constant 0 : i32
    %c0_i32_1 = arith.constant 0 : i32
    return %c0_i32, %c0_i32_0 : i32, i32
  }
  func.func @transform_6(%arg0: i32) -> (i32, i32) {
    %c0_i32 = arith.constant 0 : i32
    %c0_i32_0 = arith.constant 0 : i32
    %c0_i32_1 = arith.constant 0 : i32
    return %c0_i32, %c0_i32_0 : i32, i32
  }
  func.func @transform_7(%arg0: i32) -> (i32, i32) {
    %c0_i32 = arith.constant 0 : i32
    %c0_i32_0 = arith.constant 0 : i32
    return %c0_i32, %arg0 : i32, i32
  }
}

</mosaic_0001>

<llo_original>
// kernel: tpu_custom_call.1
$region0: #{tpu_custom_call.1}
  #allocation0 [shape = 'u32[]', space=smem, size = 0x4, offset = 0x4, fixed_abs, tag = 'smem constant byte address 0x4 - core index']
  #allocation1 [shape = 'u32[144,128]{1,0:T(1,128)}', space=vmem, size = 0x12000, scoped, tag = 'internal scratch']
  %s0 = inlined_call_operand.vmem [shape: bf16[32,128], index: 0, kind: input, shape index: {}]
  %s1 = inlined_call_operand.vmem [shape: bf16[64,32], index: 1, kind: input, shape index: {}]
  %s2 = inlined_call_operand.vmem [shape: f32[64,1], index: 2, kind: input, shape index: {}]
  %s3 = inlined_call_operand.vmem [shape: bf16[64,64], index: 3, kind: input, shape index: {}]
  %s4 = inlined_call_operand.vmem [shape: f32[64,1], index: 4, kind: input, shape index: {}]
  %s5 = inlined_call_operand.vmem [shape: bf16[8,64], index: 5, kind: input, shape index: {}]
  %s6 = inlined_call_operand.vmem [shape: f32[8,1], index: 6, kind: input, shape index: {}]
  %s7 = inlined_call_operand.hbm [shape: f32[8,128], index: 7, kind: output, shape index: {}]
  %s8 = sld [smem:[#allocation0]]
  $region38: #{tpu_custom_call.1} parent=0
    _
  %s10 = ssub.s32 1, %s8
  %s11 = scalar_select 0, %s10, %s8
  $region1: #{tpu_custom_call.1} parent=0
    #allocation2 [shape = 'u8[4096]{0}', space=vmem, size = 0x1000, scoped, tag = 'output window, operand 0, single buffered']
    #allocation3 [shape = 's32[1]{0}', space=sflag, size = 0x4, scoped, tag = 'scoped memory for tpu_custom_call.1']
    %12 = vsyncpa [#allocation3], 0
    // Predicated region
    $region2: #{tpu_custom_call.1} parent=1 // pred_check
      _
    $region3: #{tpu_custom_call.1} parent=1 // pred_check_branch
      %14 = sbr.rel (0) target = $region5
    $region4: #{tpu_custom_call.1} parent=1 // pred_region
      _
    $region5: #{tpu_custom_call.1} parent=1 // pred_fallthru
      _
    // Predicated region
    $region6: #{tpu_custom_call.1} parent=1 // pred_check
      _
    $region7: #{tpu_custom_call.1} parent=1 // pred_check_branch
      %16 = sbr.rel (0) target = $region9
    $region8: #{tpu_custom_call.1} parent=1 // pred_region
      _
    $region9: #{tpu_custom_call.1} parent=1 // pred_fallthru
      _
    // Predicated region
    $region10: #{tpu_custom_call.1} parent=1 // pred_check
      _
    $region11: #{tpu_custom_call.1} parent=1 // pred_check_branch
      %18 = sbr.rel (0) target = $region13
    $region12: #{tpu_custom_call.1} parent=1 // pred_region
      _
    $region13: #{tpu_custom_call.1} parent=1 // pred_fallthru
      _
    // Predicated region
    $region14: #{tpu_custom_call.1} parent=1 // pred_check
      _
    $region15: #{tpu_custom_call.1} parent=1 // pred_check_branch
      %20 = sbr.rel (0) target = $region17
    $region16: #{tpu_custom_call.1} parent=1 // pred_region
      _
    $region17: #{tpu_custom_call.1} parent=1 // pred_fallthru
      _
    // Predicated region
    $region18: #{tpu_custom_call.1} parent=1 // pred_check
      _
    $region19: #{tpu_custom_call.1} parent=1 // pred_check_branch
      %22 = sbr.rel (0) target = $region21
    $region20: #{tpu_custom_call.1} parent=1 // pred_region
      _
    $region21: #{tpu_custom_call.1} parent=1 // pred_fallthru
      _
    // Predicated region
    $region22: #{tpu_custom_call.1} parent=1 // pred_check
      _
    $region23: #{tpu_custom_call.1} parent=1 // pred_check_branch
      %24 = sbr.rel (0) target = $region25
    $region24: #{tpu_custom_call.1} parent=1 // pred_region
      _
    $region25: #{tpu_custom_call.1} parent=1 // pred_fallthru
      _
    // Predicated region
    $region26: #{tpu_custom_call.1} parent=1 // pred_check
      _
    $region27: #{tpu_custom_call.1} parent=1 // pred_check_branch
      %26 = sbr.rel (0) target = $region29
    $region28: #{tpu_custom_call.1} parent=1 // pred_region
      _
    $region29: #{tpu_custom_call.1} parent=1 // pred_fallthru
      _
    %v28 = vld [vmem:[%s0] sm:$0xf]
    %v29 = vld [vmem:[%s0 + $0x4] sm:$0xf]
    %v30 = vld [vmem:[%s0 + $0x8] sm:$0xf]
    %v31 = vld [vmem:[%s0 + $0xc] sm:$0xf]
    %v32 = vld [vmem:[%s1] sm:$0xf]
    %v33 = vld [vmem:[%s1 + $0x4] sm:$0xf]
    %v34 = vld [vmem:[%s1 + $0x8] sm:$0xf]
    %v35 = vld [vmem:[%s1 + $0xc] sm:$0xf]
    %v36 = vld [vmem:[%s1 + $0x10] sm:$0xf]
    %v37 = vld [vmem:[%s1 + $0x14] sm:$0xf]
    %v38 = vld [vmem:[%s1 + $0x18] sm:$0xf]
    %v39 = vld [vmem:[%s1 + $0x1c] sm:$0xf]
    %v40 = vld [vmem:[%s2] sm:$0xff]
    %v41 = vld [vmem:[%s2 + $0x8] sm:$0xff]
    %v42 = vld [vmem:[%s2 + $0x10] sm:$0xff]
    %v43 = vld [vmem:[%s2 + $0x18] sm:$0xff]
    %v44 = vld [vmem:[%s2 + $0x20] sm:$0xff]
    %v45 = vld [vmem:[%s2 + $0x28] sm:$0xff]
    %v46 = vld [vmem:[%s2 + $0x30] sm:$0xff]
    %v47 = vld [vmem:[%s2 + $0x38] sm:$0xff]
    %49 = vset.pattern.permute.xlu0 0
    %50 = vperm.xlu0 %49, %v40
    %v51 = vpop.permute.xlu0 %50
    %54 = vset.pattern.permute.xlu0 0
    %55 = vperm.xlu0 %54, %v41
    %v56 = vpop.permute.xlu0 %55
    %59 = vset.pattern.permute.xlu0 0
    %60 = vperm.xlu0 %59, %v42
    %v61 = vpop.permute.xlu0 %60
    %64 = vset.pattern.permute.xlu0 0
    %65 = vperm.xlu0 %64, %v43
    %v66 = vpop.permute.xlu0 %65
    %69 = vset.pattern.permute.xlu0 0
    %70 = vperm.xlu0 %69, %v44
    %v71 = vpop.permute.xlu0 %70
    %74 = vset.pattern.permute.xlu0 0
    %75 = vperm.xlu0 %74, %v45
    %v76 = vpop.permute.xlu0 %75
    %79 = vset.pattern.permute.xlu0 0
    %80 = vperm.xlu0 %79, %v46
    %v81 = vpop.permute.xlu0 %80
    %84 = vset.pattern.permute.xlu0 0
    %85 = vperm.xlu0 %84, %v47
    %v86 = vpop.permute.xlu0 %85
    %v96 = vunpack.c.l.b16 %v32
    %v97 = vunpack.c.l.b16 %v33
    %v98 = vunpack.c.l.b16 %v34
    %v99 = vunpack.c.l.b16 %v35
    %v100 = vunpack.c.l.b16 %v36
    %v101 = vunpack.c.l.b16 %v37
    %v102 = vunpack.c.l.b16 %v38
    %v103 = vunpack.c.l.b16 %v39
    %v104 = vpack.c.b16 %v97, %v96
    %v105 = vpack.c.b16 %v99, %v98
    %v106 = vpack.c.b16 %v101, %v100
    %v107 = vpack.c.b16 %v103, %v102
    %v112 = vunpack.c.l.b16 %v28
    %v113 = vunpack.c.l.b16 %v29
    %v114 = vunpack.c.l.b16 %v30
    %v115 = vunpack.c.l.b16 %v31
    %v116 = vpack.c.b16 %v113, %v112
    %v117 = vpack.c.b16 %v115, %v114
    %vm120 = vcmask 261120
    %v122 = vsel %vm120, %v104, 0
    %v125 = vsel %vm120, %v105, 0
    %v128 = vsel %vm120, %v106, 0
    %v131 = vsel %vm120, %v107, 0
    %133 = vmatprep.subr.bf16.mxu0 0
    %134 = vmatpush1.bf16.msra.mxu0 0
    %135 = vmatprep.subr.bf16.mxu0 0
    %136 = vmatpush1.bf16.msra.mxu0 0
    %137 = vmatprep.subr.bf16.mxu0 0
    %138 = vmatpush1.bf16.msra.mxu0 0
    %139 = vmatprep.subr.bf16.mxu0 0
    %140 = vmatpush1.bf16.msra.mxu0 0
    %141 = vmatprep.subr.bf16.mxu0 0
    %142 = vmatpush1.bf16.msra.mxu0 0
    %143 = vmatprep.subr.bf16.mxu0 0
    %144 = vmatpush1.bf16.msra.mxu0 0
    %145 = vmatprep.subr.bf16.mxu0 0
    %146 = vmatpush1.bf16.msra.mxu0 %v117
    %147 = vmatprep.subr.bf16.mxu0 0
    %148 = vmatpush1.bf16.msra.mxu0 %v116
    %149 = vmatprep.subr.bf16.mxu0 0
    %150 = vmatpush2.bf16.msra.mxu0 0
    %151 = vmatprep.subr.bf16.mxu0 0
    %152 = vmatpush2.bf16.msra.mxu0 0
    %153 = vmatprep.subr.bf16.mxu0 0
    %154 = vmatpush2.bf16.msra.mxu0 0
    %155 = vmatprep.subr.bf16.mxu0 0
    %156 = vmatpush2.bf16.msra.mxu0 0
    %157 = vmatprep.subr.bf16.mxu0 0
    %158 = vmatpush2.bf16.msra.mxu0 0
    %159 = vmatprep.subr.bf16.mxu0 0
    %160 = vmatpush2.bf16.msra.mxu0 0
    %161 = vmatprep.subr.bf16.mxu0 0
    %162 = vmatpush2.bf16.msra.mxu0 0
    %163 = vmatprep.subr.bf16.mxu0 0
    %164 = vmatpush2.bf16.msra.mxu0 0
    %165 = vmatprep.mubr.bf16.mxu0 0
    %166 = vmatmul.mubr.bf16.gmra.mxu0 %v122
    %v167 = vpop.f32.mrf.mxu0
    %v168 = vadd.f32 %v51, %v167
    %v169 = vpop.f32.mrf.mxu0
    %v170 = vpop.f32.mrf.mxu0
    %v171 = vadd.f32 %v56, %v170
    %v172 = vpop.f32.mrf.mxu0
    %173 = vmatprep.mubr.bf16.mxu0 0
    %174 = vmatmul.mubr.bf16.gmra.mxu0 %v125
    %v175 = vpop.f32.mrf.mxu0
    %v176 = vadd.f32 %v61, %v175
    %v177 = vpop.f32.mrf.mxu0
    %v178 = vpop.f32.mrf.mxu0
    %v179 = vadd.f32 %v66, %v178
    %v180 = vpop.f32.mrf.mxu0
    %181 = vmatprep.mubr.bf16.mxu0 0
    %182 = vmatmul.mubr.bf16.gmra.mxu0 %v128
    %v183 = vpop.f32.mrf.mxu0
    %v184 = vadd.f32 %v71, %v183
    %v185 = vpop.f32.mrf.mxu0
    %v186 = vpop.f32.mrf.mxu0
    %v187 = vadd.f32 %v76, %v186
    %v188 = vpop.f32.mrf.mxu0
    %189 = vmatprep.mubr.bf16.mxu0 0
    %190 = vmatmul.mubr.bf16.gmra.mxu0 %v131
    %v191 = vpop.f32.mrf.mxu0
    %v192 = vadd.f32 %v81, %v191
    %v193 = vpop.f32.mrf.mxu0
    %v194 = vpop.f32.mrf.mxu0
    %v195 = vadd.f32 %v86, %v194
    %v196 = vpop.f32.mrf.mxu0
    %197 = vdwg.mxu0
    %v198 = vmax.f32 %v168, 0.0
    %v199 = vmax.f32 %v171, 0.0
    %v200 = vmax.f32 %v176, 0.0
    %v201 = vmax.f32 %v179, 0.0
    %v202 = vmax.f32 %v184, 0.0
    %v203 = vmax.f32 %v187, 0.0
    %v204 = vmax.f32 %v192, 0.0
    %v205 = vmax.f32 %v195, 0.0
    %v206 = vpack.c.bf16 %v199, %v198
    %v207 = vpack.c.bf16 %v201, %v200
    %v208 = vpack.c.bf16 %v203, %v202
    %v209 = vpack.c.bf16 %v205, %v204
    %v210 = vld [vmem:[%s3] sm:$0xf]
    %v211 = vld [vmem:[%s3 + $0x4] sm:$0xf]
    %v212 = vld [vmem:[%s3 + $0x8] sm:$0xf]
    %v213 = vld [vmem:[%s3 + $0xc] sm:$0xf]
    %v214 = vld [vmem:[%s3 + $0x10] sm:$0xf]
    %v215 = vld [vmem:[%s3 + $0x14] sm:$0xf]
    %v216 = vld [vmem:[%s3 + $0x18] sm:$0xf]
    %v217 = vld [vmem:[%s3 + $0x1c] sm:$0xf]
    %v218 = vld [vmem:[%s4] sm:$0xff]
    %v219 = vld [vmem:[%s4 + $0x8] sm:$0xff]
    %v220 = vld [vmem:[%s4 + $0x10] sm:$0xff]
    %v221 = vld [vmem:[%s4 + $0x18] sm:$0xff]
    %v222 = vld [vmem:[%s4 + $0x20] sm:$0xff]
    %v223 = vld [vmem:[%s4 + $0x28] sm:$0xff]
    %v224 = vld [vmem:[%s4 + $0x30] sm:$0xff]
    %v225 = vld [vmem:[%s4 + $0x38] sm:$0xff]
    %227 = vset.pattern.permute.xlu0 0
    %228 = vperm.xlu0 %227, %v218
    %v229 = vpop.permute.xlu0 %228
    %232 = vset.pattern.permute.xlu0 0
    %233 = vperm.xlu0 %232, %v219
    %v234 = vpop.permute.xlu0 %233
    %237 = vset.pattern.permute.xlu0 0
    %238 = vperm.xlu0 %237, %v220
    %v239 = vpop.permute.xlu0 %238
    %242 = vset.pattern.permute.xlu0 0
    %243 = vperm.xlu0 %242, %v221
    %v244 = vpop.permute.xlu0 %243
    %247 = vset.pattern.permute.xlu0 0
    %248 = vperm.xlu0 %247, %v222
    %v249 = vpop.permute.xlu0 %248
    %252 = vset.pattern.permute.xlu0 0
    %253 = vperm.xlu0 %252, %v223
    %v254 = vpop.permute.xlu0 %253
    %257 = vset.pattern.permute.xlu0 0
    %258 = vperm.xlu0 %257, %v224
    %v259 = vpop.permute.xlu0 %258
    %262 = vset.pattern.permute.xlu0 0
    %263 = vperm.xlu0 %262, %v225
    %v264 = vpop.permute.xlu0 %263
    %v274 = vunpack.c.l.b16 %v210
    %v275 = vunpack.c.l.b16 %v211
    %v276 = vunpack.c.l.b16 %v212
    %v277 = vunpack.c.l.b16 %v213
    %v278 = vunpack.c.l.b16 %v214
    %v279 = vunpack.c.l.b16 %v215
    %v280 = vunpack.c.l.b16 %v216
    %v281 = vunpack.c.l.b16 %v217
    %v282 = vpack.c.b16 %v275, %v274
    %v283 = vpack.c.b16 %v277, %v276
    %v284 = vpack.c.b16 %v279, %v278
    %v285 = vpack.c.b16 %v281, %v280
    %vm286 = vcmask 523264
    %v288 = vsel %vm286, %v282, 0
    %v291 = vsel %vm286, %v283, 0
    %v294 = vsel %vm286, %v284, 0
    %v297 = vsel %vm286, %v285, 0
    %299 = vmatprep.subr.bf16.mxu0 0
    %300 = vmatpush1.bf16.msra.mxu0 0
    %301 = vmatprep.subr.bf16.mxu0 0
    %302 = vmatpush1.bf16.msra.mxu0 0
    %303 = vmatprep.subr.bf16.mxu0 0
    %304 = vmatpush1.bf16.msra.mxu0 0
    %305 = vmatprep.subr.bf16.mxu0 0
    %306 = vmatpush1.bf16.msra.mxu0 0
    %307 = vmatprep.subr.bf16.mxu0 0
    %308 = vmatpush1.bf16.msra.mxu0 %v209
    %309 = vmatprep.subr.bf16.mxu0 0
    %310 = vmatpush1.bf16.msra.mxu0 %v208
    %311 = vmatprep.subr.bf16.mxu0 0
    %312 = vmatpush1.bf16.msra.mxu0 %v207
    %313 = vmatprep.subr.bf16.mxu0 0
    %314 = vmatpush1.bf16.msra.mxu0 %v206
    %315 = vmatprep.subr.bf16.mxu0 0
    %316 = vmatpush2.bf16.msra.mxu0 0
    %317 = vmatprep.subr.bf16.mxu0 0
    %318 = vmatpush2.bf16.msra.mxu0 0
    %319 = vmatprep.subr.bf16.mxu0 0
    %320 = vmatpush2.bf16.msra.mxu0 0
    %321 = vmatprep.subr.bf16.mxu0 0
    %322 = vmatpush2.bf16.msra.mxu0 0
    %323 = vmatprep.subr.bf16.mxu0 0
    %324 = vmatpush2.bf16.msra.mxu0 0
    %325 = vmatprep.subr.bf16.mxu0 0
    %326 = vmatpush2.bf16.msra.mxu0 0
    %327 = vmatprep.subr.bf16.mxu0 0
    %328 = vmatpush2.bf16.msra.mxu0 0
    %329 = vmatprep.subr.bf16.mxu0 0
    %330 = vmatpush2.bf16.msra.mxu0 0
    %331 = vmatprep.mubr.bf16.mxu0 0
    %332 = vmatmul.mubr.bf16.gmra.mxu0 %v288
    %v333 = vpop.f32.mrf.mxu0
    %v334 = vadd.f32 %v229, %v333
    %v335 = vpop.f32.mrf.mxu0
    %v336 = vpop.f32.mrf.mxu0
    %v337 = vadd.f32 %v234, %v336
    %v338 = vpop.f32.mrf.mxu0
    %339 = vmatprep.mubr.bf16.mxu0 0
    %340 = vmatmul.mubr.bf16.gmra.mxu0 %v291
    %v341 = vpop.f32.mrf.mxu0
    %v342 = vadd.f32 %v239, %v341
    %v343 = vpop.f32.mrf.mxu0
    %v344 = vpop.f32.mrf.mxu0
    %v345 = vadd.f32 %v244, %v344
    %v346 = vpop.f32.mrf.mxu0
    %347 = vmatprep.mubr.bf16.mxu0 0
    %348 = vmatmul.mubr.bf16.gmra.mxu0 %v294
    %v349 = vpop.f32.mrf.mxu0
    %v350 = vadd.f32 %v249, %v349
    %v351 = vpop.f32.mrf.mxu0
    %v352 = vpop.f32.mrf.mxu0
    %v353 = vadd.f32 %v254, %v352
    %v354 = vpop.f32.mrf.mxu0
    %355 = vmatprep.mubr.bf16.mxu0 0
    %356 = vmatmul.mubr.bf16.gmra.mxu0 %v297
    %v357 = vpop.f32.mrf.mxu0
    %v358 = vadd.f32 %v259, %v357
    %v359 = vpop.f32.mrf.mxu0
    %v360 = vpop.f32.mrf.mxu0
    %v361 = vadd.f32 %v264, %v360
    %v362 = vpop.f32.mrf.mxu0
    %363 = vdwg.mxu0
    %v364 = vmax.f32 %v334, 0.0
    %v365 = vmax.f32 %v337, 0.0
    %v366 = vmax.f32 %v342, 0.0
    %v367 = vmax.f32 %v345, 0.0
    %v368 = vmax.f32 %v350, 0.0
    %v369 = vmax.f32 %v353, 0.0
    %v370 = vmax.f32 %v358, 0.0
    %v371 = vmax.f32 %v361, 0.0
    %v372 = vpack.c.bf16 %v365, %v364
    %v373 = vpack.c.bf16 %v367, %v366
    %v374 = vpack.c.bf16 %v369, %v368
    %v375 = vpack.c.bf16 %v371, %v370
    %v376 = vld [vmem:[%s5] sm:$0xf]
    %v377 = vld [vmem:[%s6] sm:$0xff]
    %379 = vset.pattern.permute.xlu0 0
    %380 = vperm.xlu0 %379, %v377
    %v381 = vpop.permute.xlu0 %380
    %v384 = vsel %vm286, %v376, 0
    %386 = vmatprep.subr.bf16.mxu0 0
    %387 = vmatpush1.bf16.msra.mxu0 0
    %388 = vmatprep.subr.bf16.mxu0 0
    %389 = vmatpush1.bf16.msra.mxu0 0
    %390 = vmatprep.subr.bf16.mxu0 0
    %391 = vmatpush1.bf16.msra.mxu0 0
    %392 = vmatprep.subr.bf16.mxu0 0
    %393 = vmatpush1.bf16.msra.mxu0 0
    %394 = vmatprep.subr.bf16.mxu0 0
    %395 = vmatpush1.bf16.msra.mxu0 %v375
    %396 = vmatprep.subr.bf16.mxu0 0
    %397 = vmatpush1.bf16.msra.mxu0 %v374
    %398 = vmatprep.subr.bf16.mxu0 0
    %399 = vmatpush1.bf16.msra.mxu0 %v373
    %400 = vmatprep.subr.bf16.mxu0 0
    %401 = vmatpush1.bf16.msra.mxu0 %v372
    %402 = vmatprep.subr.bf16.mxu0 0
    %403 = vmatpush2.bf16.msra.mxu0 0
    %404 = vmatprep.subr.bf16.mxu0 0
    %405 = vmatpush2.bf16.msra.mxu0 0
    %406 = vmatprep.subr.bf16.mxu0 0
    %407 = vmatpush2.bf16.msra.mxu0 0
    %408 = vmatprep.subr.bf16.mxu0 0
    %409 = vmatpush2.bf16.msra.mxu0 0
    %410 = vmatprep.subr.bf16.mxu0 0
    %411 = vmatpush2.bf16.msra.mxu0 0
    %412 = vmatprep.subr.bf16.mxu0 0
    %413 = vmatpush2.bf16.msra.mxu0 0
    %414 = vmatprep.subr.bf16.mxu0 0
    %415 = vmatpush2.bf16.msra.mxu0 0
    %416 = vmatprep.subr.bf16.mxu0 0
    %417 = vmatpush2.bf16.msra.mxu0 0
    %418 = vmatprep.mubr.bf16.mxu0 0
    %419 = vmatmul.mubr.bf16.gmra.mxu0 %v384
    %v420 = vpop.f32.mrf.mxu0
    %v421 = vadd.f32 %v381, %v420
    %v422 = vpop.f32.mrf.mxu0
    %v423 = vpop.f32.mrf.mxu0
    %v424 = vpop.f32.mrf.mxu0
    %425 = vdwg.mxu0
    %v426 = vmax.f32 %v421, 0.0
    %v427 = vadd.f32 %v426, 0.0001
    %v428 = vlog2.pop %v427
    %v429 = vmul.f32 %v428, 0.6931472
    %430 = vst [vmem:[#allocation2] sm:$0xff] %v429
    // Predicated region
    $region30: #{tpu_custom_call.1} parent=1 // pred_check
      _
    $region31: #{tpu_custom_call.1} parent=1 // pred_check_branch
      %432 = sbr.rel (0) target = $region33
    $region32: #{tpu_custom_call.1} parent=1 // pred_region
      %s434 = ssub.s32 128, 128
      %435 = vsyncadd [#allocation3], %s434
      %s437 = sshll.u32 [#allocation2], 4
      %s438 = int_to_ptr.vmem [resolvable:$true] %s437
      %440 = dma.vmem_to_hbm [thread:$0]  %s438, 128, %s7, [#allocation3]
    $region33: #{tpu_custom_call.1} parent=1 // pred_fallthru
      _
    // Predicated region
    $region34: #{tpu_custom_call.1} parent=1 // pred_check
      _
    $region35: #{tpu_custom_call.1} parent=1 // pred_check_branch
      %442 = sbr.rel (0) target = $region37
    $region36: #{tpu_custom_call.1} parent=1 // pred_region
      %443 = dma.done [#allocation3], 128
    $region37: #{tpu_custom_call.1} parent=1 // pred_fallthru
      _
    %444 = vsyncpa [#allocation3], 1

</llo_original>
